<compile_context>
chip_gen: v7x
topology: tpu7x:2x2x1
jax: 0.10.0
libtpu: 0.0.40
codegen_flags: <defaults>
</compile_context>

<pallas_src>
import functools

import jax
import jax.numpy as jnp
from jax.experimental import pallas as pl
from jax.experimental.pallas import tpu as pltpu


_TRANSCENDENTAL = ("sigmoid", "swish", "gelu")
_VMEM_WORKSET_BUDGET = 24 * 1024 * 1024   # double-buffered block bytes, fits all gens
_VMEM_LIMIT_BYTES = 48 * 1024 * 1024      # > default scoped limit, < v7x 64 MiB physical
_MAX_BLOCK_ROWS = 1024
_MAX_BLOCK_H = 2048


def _act(name, gate):
    if name == "relu":
        return jnp.maximum(gate, 0)
    if name == "gelu":
        # torch.nn.GELU default is the exact (erf) formulation
        return jax.nn.gelu(gate, approximate=False)
    if name == "swish":
        return gate * jax.nn.sigmoid(gate)
    if name == "sigmoid":
        return jax.nn.sigmoid(gate)
    return gate  # identity


# ---------------- kernels ----------------

def _glu_split_kernel(h_ref, g_ref, o_ref, *, act_name, upcast):
    h = h_ref[...]
    g = g_ref[...]
    if upcast:
        h = h.astype(jnp.float32)
        g = g.astype(jnp.float32)
    o_ref[...] = (h * _act(act_name, g)).astype(o_ref.dtype)


def _glu_fused_kernel(x_ref, o_ref, *, half, act_name, upcast):
    x = x_ref[...]
    h = x[:, :half]
    g = x[:, half:]
    if upcast:
        h = h.astype(jnp.float32)
        g = g.astype(jnp.float32)
    o_ref[...] = (h * _act(act_name, g)).astype(o_ref.dtype)


# ---------------- tile selection ----------------

def _choose_block_h(half, cap=_MAX_BLOCK_H):
    """Largest multiple of 128 that divides `half` and is <= cap; None if unaligned."""
    if half % 128 != 0:
        return None
    bh = min(half, cap)
    bh -= bh % 128
    while half % bh != 0:
        bh -= 128
    return bh


def _choose_block_rows(rows, bytes_per_row, cap=_MAX_BLOCK_ROWS):
    cap = max(8, cap - cap % 8)          # keep block_rows a multiple of 8
    br = cap
    while br > 8 and br * bytes_per_row > _VMEM_WORKSET_BUDGET:
        br //= 2
    if rows <= br:
        return rows                       # full extent (always legal)
    return br


# ---------------- wrappers ----------------

def _glu_last_dim(x, act_name, max_block_rows=_MAX_BLOCK_ROWS):
    *lead, two_h = x.shape
    half = two_h // 2
    rows = 1
    for s in lead:
        rows *= s
    x2d = x.reshape(rows, two_h)

    itemsize = x.dtype.itemsize
    upcast = act_name in _TRANSCENDENTAL
    block_h = _choose_block_h(half)

    if block_h is not None:
        # Fast path: two lane-aligned half-blocks from the same HBM buffer.
        nbh = half // block_h
        bytes_per_row = 2 * 3 * block_h * itemsize      # 2 buffers x (h + g + out)
        block_rows = _choose_block_rows(rows, bytes_per_row, cap=max_block_rows)
        grid = (pl.cdiv(rows, block_rows), nbh)
        kernel = functools.partial(_glu_split_kernel, act_name=act_name,
                                   upcast=upcast)
        out2d = pl.pallas_call(
            kernel,
            out_shape=jax.ShapeDtypeStruct((rows, half), x.dtype),
            grid_spec=pltpu.PrefetchScalarGridSpec(
                num_scalar_prefetch=0,
                grid=grid,
                in_specs=[
                    pl.BlockSpec((block_rows, block_h), lambda i, j: (i, j)),
                    pl.BlockSpec((block_rows, block_h),
                                 lambda i, j, nbh=nbh: (i, j + nbh)),
                ],
                out_specs=pl.BlockSpec((block_rows, block_h),
                                       lambda i, j: (i, j)),
            ),
            compiler_params=pltpu.CompilerParams(
                dimension_semantics=("parallel", "parallel"),
                vmem_limit_bytes=_VMEM_LIMIT_BYTES,
            ),
        )(x2d, x2d)
    else:
        # Unaligned half (< 128 or not a multiple of 128): full-width block,
        # in-kernel split. Stores on the output are masked when half % 128 != 0.
        bytes_per_row = 2 * (two_h + half) * itemsize   # 2 buffers x (in + out)
        block_rows = _choose_block_rows(rows, bytes_per_row, cap=max_block_rows)
        grid = (pl.cdiv(rows, block_rows),)
        kernel = functools.partial(_glu_fused_kernel, half=half,
                                   act_name=act_name, upcast=upcast)
        out2d = pl.pallas_call(
            kernel,
            out_shape=jax.ShapeDtypeStruct((rows, half), x.dtype),
            grid_spec=pltpu.PrefetchScalarGridSpec(
                num_scalar_prefetch=0,
                grid=grid,
                in_specs=[pl.BlockSpec((block_rows, two_h), lambda i: (i, 0))],
                out_specs=pl.BlockSpec((block_rows, half), lambda i: (i, 0)),
            ),
            compiler_params=pltpu.CompilerParams(
                dimension_semantics=("parallel",),
                vmem_limit_bytes=_VMEM_LIMIT_BYTES,
            ),
        )(x2d)

    return out2d.reshape(*lead, half) if lead else out2d.reshape(half)


def glu_pallas(x, dim=-1, act_name="sigmoid", max_block_rows=_MAX_BLOCK_ROWS):
    """GLU forward: split `x` into (half, gate) along `dim`, return half * act(gate)."""
    act_name = act_name.lower()
    axis = dim % x.ndim
    if x.shape[axis] % 2 != 0:
        raise ValueError("GLU split dimension must have even size")
    if axis == x.ndim - 1:
        return _glu_last_dim(x, act_name, max_block_rows)
    # Non-last split dim: move it to the lane axis (XLA materializes a transpose).
    # TODO(synk): a 3D BlockSpec path could avoid the HBM transpose for dim != -1.
    xt = jnp.moveaxis(x, axis, -1)
    out = _glu_last_dim(xt, act_name, max_block_rows)
    return jnp.moveaxis(out, -1, axis)


def glu_ref(x, dim=-1, act_name="sigmoid"):
    h, g = jnp.split(x, 2, axis=dim)
    a = _act(act_name.lower(), g.astype(jnp.float32))
    return (h.astype(jnp.float32) * a).astype(x.dtype)


if __name__ == "__main__":
    ok = True

    # Small module-consistent shape: (batch, seq, 2*hidden), hidden=32
    # -> exercises the unaligned (fallback) path for every activation.
    B, S, H = 2, 8, 32
    x = jax.random.normal(jax.random.PRNGKey(0), (B, S, 2 * H), dtype=jnp.float32)
    for act in ("sigmoid", "swish", "relu", "gelu", "identity"):
        out = jax.block_until_ready(glu_pallas(x, dim=-1, act_name=act))
        ref = glu_ref(x, dim=-1, act_name=act)
        ok &= out.shape == (B, S, H)
        ok &= bool(jnp.allclose(out, ref, atol=1e-5, rtol=1e-5))

    # Lane-aligned path (half = 256, multiple of 128): two-input tiled kernel.
    x_al = jax.random.normal(jax.random.PRNGKey(1), (4, 8, 512), dtype=jnp.float32)
    out = jax.block_until_ready(glu_pallas(x_al, dim=-1, act_name="swish"))
    ok &= bool(jnp.allclose(out, glu_ref(x_al, dim=-1, act_name="swish"),
                            atol=1e-5, rtol=1e-5))

    # bf16 aligned path.
    x_bf = jax.random.normal(jax.random.PRNGKey(2), (4, 8, 512)).astype(jnp.bfloat16)
    out = jax.block_until_ready(glu_pallas(x_bf, dim=-1, act_name="sigmoid"))
    ok &= bool(jnp.allclose(out.astype(jnp.float32),
                            glu_ref(x_bf, dim=-1, act_name="sigmoid").astype(jnp.float32),
                            atol=2e-2, rtol=2e-2))

    # Ragged row count with a forced small row tile -> cdiv grid + masked last tile.
    x_rag = jax.random.normal(jax.random.PRNGKey(3), (20, 512), dtype=jnp.float32)
    out = jax.block_until_ready(glu_pallas(x_rag, dim=-1, act_name="sigmoid",
                                           max_block_rows=8))
    ok &= bool(jnp.allclose(out, glu_ref(x_rag, dim=-1, act_name="sigmoid"),
                            atol=1e-5, rtol=1e-5))

    # Non-default split dim (dim=1) through the transpose-glue path.
    x2 = jax.random.normal(jax.random.PRNGKey(4), (B, 2 * H, S), dtype=jnp.float32)
    out2 = jax.block_until_ready(glu_pallas(x2, dim=1, act_name="sigmoid"))
    ok &= bool(jnp.allclose(out2, glu_ref(x2, dim=1, act_name="sigmoid"),
                            atol=1e-5, rtol=1e-5))

    if ok:
        print("KERNEL_OK")
</pallas_src>

<mosaic_0001>
module attributes {stable_mosaic.version = 11 : i64} {
  func.func @_glu_fused_kernel(%arg0: i32, %arg1: memref<16x64xf32, #tpu.memory_space<vmem>>, %arg2: memref<16x32xf32, #tpu.memory_space<vmem>>) attributes {dimension_semantics = [#tpu.dimension_semantics<parallel>], iteration_bounds = array<i64: 1>, scalar_prefetch = 0 : i64, scratch_operands = 0 : i64, tpu.core_type = #tpu.core_type<tc>, window_params = [{transform_indices = @transform_0, window_bounds = array<i64: 16, 64>}, {transform_indices = @transform_1, window_bounds = array<i64: 16, 32>}]} {
    %c0 = arith.constant 0 : index
    %c0_0 = arith.constant 0 : index
    %0 = vector.load %arg1[%c0, %c0_0] : memref<16x64xf32, #tpu.memory_space<vmem>>, vector<16x64xf32>
    %1 = vector.extract_strided_slice %0 {offsets = [0, 0], sizes = [16, 32], strides = [1, 1]} : vector<16x64xf32> to vector<16x32xf32>
    %2 = vector.extract_strided_slice %0 {offsets = [0, 32], sizes = [16, 32], strides = [1, 1]} : vector<16x64xf32> to vector<16x32xf32>
    %3 = arith.negf %2 : vector<16x32xf32>
    %4 = math.exp %3 : vector<16x32xf32>
    %cst = arith.constant 1.000000e+00 : f32
    %5 = vector.broadcast %cst : f32 to vector<16x32xf32>
    %6 = arith.addf %5, %4 : vector<16x32xf32>
    %7 = arith.divf %5, %6 : vector<16x32xf32>
    %8 = arith.mulf %1, %7 : vector<16x32xf32>
    %c0_1 = arith.constant 0 : index
    %c0_2 = arith.constant 0 : index
    %9 = vector.load %arg2[%c0_1, %c0_2] : memref<16x32xf32, #tpu.memory_space<vmem>>, vector<16x32xf32>
    tpu.vector_store %arg2[%c0_1, %c0_2], %8 {strides = array<i32>} : memref<16x32xf32, #tpu.memory_space<vmem>>, vector<16x32xf32>,
    return
  }
  func.func @transform_0(%arg0: i32) -> (i32, i32) {
    %c0_i32 = arith.constant 0 : i32
    %c0_i32_0 = arith.constant 0 : i32
    return %arg0, %c0_i32 : i32, i32
  }
  func.func @transform_1(%arg0: i32) -> (i32, i32) {
    %c0_i32 = arith.constant 0 : i32
    %c0_i32_0 = arith.constant 0 : i32
    return %arg0, %c0_i32 : i32, i32
  }
}

</mosaic_0001>

<llo_original>
// kernel: tpu_custom_call.1
$region0: #{tpu_custom_call.1}
  #allocation0 [shape = 'u32[]', space=smem, size = 0x4, offset = 0x4, fixed_abs, tag = 'smem constant byte address 0x4 - core index']
  #allocation1 [shape = 'u32[144,128]{1,0:T(1,128)}', space=vmem, size = 0x12000, scoped, tag = 'internal scratch']
  %s0 = inlined_call_operand.hbm [shape: f32[16,64], index: 0, kind: input, shape index: {}]
  %s1 = inlined_call_operand.hbm [shape: f32[16,32], index: 1, kind: output, shape index: {}]
  %s2 = sld [smem:[#allocation0]]
  $region18: #{tpu_custom_call.1} parent=0
    _
  %s4 = ssub.s32 1, %s2
  %s5 = scalar_select 0, %s4, %s2
  $region1: #{tpu_custom_call.1} parent=0
    #allocation2 [shape = 'u8[8192]{0}', space=vmem, size = 0x2000, scoped, tag = 'input window, operand 0, single buffered']
    #allocation3 [shape = 's32[1]{0}', space=sflag, size = 0x4, scoped, tag = 'scoped memory for tpu_custom_call.1']
    #allocation4 [shape = 's32[1]{0}', space=sflag, size = 0x4, scoped, tag = 'scoped memory for tpu_custom_call.1']
    #allocation5 [shape = 'u8[8192]{0}', space=vmem, size = 0x2000, scoped, tag = 'output window, operand 0, single buffered']
    %6 = vsyncpa [#allocation3], 0
    %7 = vsyncpa [#allocation4], 0
    // Predicated region
    $region2: #{tpu_custom_call.1} parent=1 // pred_check
      _
    $region3: #{tpu_custom_call.1} parent=1 // pred_check_branch
      %9 = sbr.rel (0) target = $region5
    $region4: #{tpu_custom_call.1} parent=1 // pred_region
      %s11 = ssub.s32 256, 256
      %12 = vsyncadd [#allocation3], %s11
      %s13 = sshll.u32 [#allocation2], 4
      %s14 = int_to_ptr.vmem [resolvable:$true] %s13
      %19 = dma.hbm_to_vmem [thread:$0]  %s0, 256, %s14, [#allocation3], 128, 128, 8
    $region5: #{tpu_custom_call.1} parent=1 // pred_fallthru
      _
    // Predicated region
    $region6: #{tpu_custom_call.1} parent=1 // pred_check
      _
    $region7: #{tpu_custom_call.1} parent=1 // pred_check_branch
      %21 = sbr.rel (0) target = $region9
    $region8: #{tpu_custom_call.1} parent=1 // pred_region
      %22 = dma.done [#allocation3], 256
    $region9: #{tpu_custom_call.1} parent=1 // pred_fallthru
      _
    %v23 = vld [vmem:[#allocation2] sm:$0xff]
    %v24 = vld [vmem:[#allocation2 + $0x8] sm:$0xff]
    %v25 = vxor.u32 %v23, 2147483648
    %v26 = vxor.u32 %v24, 2147483648
    %v27 = vmul.f32 %v25, 1.442695
    %v28 = vpow.pop %v27
    %v29 = vmul.f32 %v26, 1.442695
    %v30 = vpow.pop %v29
    %v31 = vadd.f32 %v28, 1.0
    %v32 = vadd.f32 %v30, 1.0
    %v33 = vrcp.pop %v31
    %v34 = vmul.f32 1.0, %v33
    %v35 = vrcp.pop %v32
    %v36 = vmul.f32 1.0, %v35
    %39 = vrot.lane.b32.xlu0 %v34, 96
    %v40 = vpop.permute.xlu0 %39
    %41 = vrot.lane.b32.xlu0 %v36, 96
    %v42 = vpop.permute.xlu0 %41
    %v45 = vmul.f32 %v23, %v40
    %v46 = vmul.f32 %v24, %v42
    %vm47 = vcmask 261120
    %48 = vst.msk [vmem:[#allocation5] sm:$0xff] %vm47, %v45
    %49 = vst.msk [vmem:[#allocation5 + $0x8] sm:$0xff] %vm47, %v46
    // Predicated region
    $region10: #{tpu_custom_call.1} parent=1 // pred_check
      _
    $region11: #{tpu_custom_call.1} parent=1 // pred_check_branch
      %51 = sbr.rel (0) target = $region13
    $region12: #{tpu_custom_call.1} parent=1 // pred_region
      %s53 = ssub.s32 256, 256
      %54 = vsyncadd [#allocation4], %s53
      %s55 = sshll.u32 [#allocation5], 4
      %s56 = int_to_ptr.vmem [resolvable:$true] %s55
      %61 = dma.vmem_to_hbm [thread:$0]  %s56, 256, %s1, [#allocation4], 128, 128, 8
    $region13: #{tpu_custom_call.1} parent=1 // pred_fallthru
      _
    // Predicated region
    $region14: #{tpu_custom_call.1} parent=1 // pred_check
      _
    $region15: #{tpu_custom_call.1} parent=1 // pred_check_branch
      %63 = sbr.rel (0) target = $region17
    $region16: #{tpu_custom_call.1} parent=1 // pred_region
      %64 = dma.done [#allocation4], 256
    $region17: #{tpu_custom_call.1} parent=1 // pred_fallthru
      _
    %65 = vsyncpa [#allocation3], 1
    %66 = vsyncpa [#allocation4], 1

</llo_original>
